<compile_context>
chip_gen: v7x
topology: tpu7x:2x2x1
jax: 0.10.0
libtpu: 0.0.40
codegen_flags: <defaults>
</compile_context>

<pallas_src>
import jax
import jax.numpy as jnp
from jax.experimental import pallas as pl
from jax.experimental.pallas import tpu as pltpu


def _round_up(x, m):
    return ((x + m - 1) // m) * m


def _default_vmem_limit_bytes():
    """Per-generation scoped-VMEM limit: ~75% of physical, 48 MiB fallback."""
    try:
        cap = int(pltpu.get_tpu_info().vmem_capacity_bytes)
    except Exception:
        cap = 64 << 20          # conservative: v7x has 64 MiB VMEM per TC
    return min(int(cap * 3 // 4), 96 << 20)


def _pick_tiles(B, C, HW, F_pad, x_itemsize, tpix_cap, vmem_limit_bytes):
    """Pick (pixel-lane tile, batch slabs per step) from a VMEM budget.

    Budget per output lane:
      x tile  : 2 (double-buffer) * C * x_itemsize
      hidden h: F_pad * 4   (f32 (F_pad, tpix) intermediate of the first conv)
      out tile: 2 * 1 * 4
    """
    tpix_cap = max(128, (tpix_cap // 128) * 128)
    per_lane = 2 * C * x_itemsize + F_pad * 4 + 2 * 4
    budget = max(vmem_limit_bytes - (2 << 20), 128 * per_lane)  # headroom for weights
    max_lanes = max(128, (budget // per_lane) // 128 * 128)
    cap_lanes = min(tpix_cap, max_lanes)
    tpix = min(_round_up(HW, 128), cap_lanes)
    # Merge batch slabs when HW is small relative to the lane budget (small
    # feature maps); cap the static unroll at 16 slabs.
    nb = int(max(1, min(B, cap_lanes // tpix, 16)))
    return int(tpix), nb


def ccnn_fc_kernel(x_ref, w1t_ref, b1_ref, w2_ref, b2_ref, o_ref):
    # x_ref  : (nb, C, tpix)  native dtype  pixel tile, channels on sublanes
    # w1t_ref: (F_pad, C)     bf16          first 1x1 conv weight, transposed
    # b1_ref : (F_pad, 1)     f32
    # w2_ref : (F_pad, 1)     f32           second 1x1 conv weight as a column
    # b2_ref : (1,)           f32           SMEM scalar
    # o_ref  : (nb, 1, tpix)  f32           lane-dense output tile
    w1t = w1t_ref[...]
    b1 = b1_ref[...]
    w2 = w2_ref[...]
    b2 = b2_ref[0]
    nb = x_ref.shape[0]
    for n in range(nb):                       # static unroll; nb==1 for large images
        # In-kernel cast to the matmul dtype (VPU work, hidden under the x DMA);
        # avoids a separate host-side astype pass over the whole tensor.
        x = x_ref[n].astype(w1t.dtype)                        # (C, tpix)
        h = jnp.dot(w1t, x, preferred_element_type=jnp.float32)   # (F_pad, tpix) MXU
        h = jnp.maximum(h + b1, 0.0)                          # bias + ReLU in f32 (VPU)
        # Second 1x1 conv (Cout=1): multiply + sublane reduction (VPU/XLU) instead
        # of a lane-sparse 1-column MXU matmul.
        y = jnp.sum(h * w2, axis=0, keepdims=True)            # (1, tpix)
        o_ref[n] = jax.nn.sigmoid(y + b2)


def ccnn_fc_forward(x_nchw, w1, b1, w2, b2, *, tpix_cap=16384,
                    compute_dtype=jnp.bfloat16, vmem_limit_bytes=None):
    """Applies the fc head (two 1x1 convs) + sigmoid.

    x_nchw: (B, 288, H, W) in its native dtype (f32 or bf16 -- no host-side
            cast/pad pass is added); w1: (288, F); b1: (F,); w2: (F, 1); b2: (1,).
    Returns (B, 1, H, W) float32, matching the PyTorch module output.
    """
    B, C, H, W = x_nchw.shape
    F_ = w1.shape[1]
    assert w1.shape == (C, F_) and w2.shape == (F_, 1)
    HW = H * W

    # channels-on-sublanes / pixels-on-lanes: pure reshape of NCHW, no transpose,
    # no host-side pad or dtype conversion of the big activation tensor.
    x = x_nchw.reshape(B, C, HW)

    # Pad F (sublane axis of the hidden layer) to a multiple of 8. Zero padding
    # is exact: ReLU(0 + 0) = 0 and zero w2 rows contribute nothing. Weights are
    # tiny (F x 288), so these host-side transforms are negligible.
    F_pad = _round_up(F_, 8)
    w1t = jnp.asarray(w1, jnp.float32).T                      # (F, C)
    b1c = jnp.asarray(b1, jnp.float32).reshape(F_, 1)
    w2c = jnp.asarray(w2, jnp.float32).reshape(F_, 1)
    if F_pad != F_:
        w1t = jnp.pad(w1t, ((0, F_pad - F_), (0, 0)))
        b1c = jnp.pad(b1c, ((0, F_pad - F_), (0, 0)))
        w2c = jnp.pad(w2c, ((0, F_pad - F_), (0, 0)))
    w1t = w1t.astype(compute_dtype)
    b2c = jnp.asarray(b2, jnp.float32).reshape(1,)

    if vmem_limit_bytes is None:
        vmem_limit_bytes = _default_vmem_limit_bytes()

    x_item = x.dtype.itemsize
    tpix, nb = _pick_tiles(B, C, HW, F_pad, x_item, tpix_cap, vmem_limit_bytes)

    # Non-divisible dims are fine: Pallas pads the last input tile (garbage
    # columns only affect garbage output columns of a per-pixel 1x1 conv) and
    # masks the out-of-bounds part of the output tile on writeback.
    grid = (pl.cdiv(B, nb), pl.cdiv(HW, tpix))

    cost = pl.CostEstimate(
        flops=2 * B * HW * C * F_pad + 3 * B * HW * F_pad,
        transcendentals=2 * B * HW,                           # sigmoid ~ exp + recip
        bytes_accessed=(B * C * HW * x_item                   # read x
                        + B * HW * 4                          # write out
                        + w1t.size * w1t.dtype.itemsize
                        + (b1c.size + w2c.size + 1) * 4),
    )

    out = pl.pallas_call(
        ccnn_fc_kernel,
        out_shape=jax.ShapeDtypeStruct((B, 1, HW), jnp.float32),
        grid_spec=pltpu.PrefetchScalarGridSpec(
            num_scalar_prefetch=0,
            grid=grid,
            in_specs=[
                pl.BlockSpec((nb, C, tpix), lambda b, j: (b, 0, j)),     # x tile
                pl.BlockSpec((F_pad, C), lambda b, j: (0, 0)),           # w1t (resident)
                pl.BlockSpec((F_pad, 1), lambda b, j: (0, 0)),           # b1
                pl.BlockSpec((F_pad, 1), lambda b, j: (0, 0)),           # w2
                pl.BlockSpec(memory_space=pltpu.MemorySpace.SMEM),       # b2 scalar
            ],
            out_specs=pl.BlockSpec((nb, 1, tpix), lambda b, j: (b, 0, j)),
        ),
        compiler_params=pltpu.CompilerParams(
            dimension_semantics=("parallel", "parallel"),
            vmem_limit_bytes=int(vmem_limit_bytes),
        ),
        cost_estimate=cost,
    )(x, w1t, b1c, w2c, b2c)

    return out.reshape(B, 1, H, W)            # NCHW (B, 1, H, W), no transpose needed


def ccnn_fc_reference(x_nchw, w1, b1, w2, b2):
    """Plain-JAX f32 reference of the same fc head for a correctness check."""
    B, C, H, W = x_nchw.shape
    x = jnp.transpose(x_nchw.astype(jnp.float32), (0, 2, 3, 1)).reshape(B * H * W, C)
    h = jnp.maximum(x @ w1 + b1[None, :], 0.0)
    y = jax.nn.sigmoid(h @ w2 + b2[None, :])
    return jnp.transpose(y.reshape(B, H, W, 1), (0, 3, 1, 2))


if __name__ == "__main__":
    # Shapes implied by the module: fc input channels = 288 (fixed by __init__),
    # FC_FILTERS = 64, small spatial 16x16, batch 2.
    B, C_IN, H, W = 2, 288, 16, 16
    FC_FILTERS = 64

    key = jax.random.PRNGKey(0)
    kx, kw1, kb1, kw2, kb2 = jax.random.split(key, 5)

    # depth_volumes (NCHW), deterministic synthetic input.
    x = jax.random.normal(kx, (B, C_IN, H, W), dtype=jnp.float32)

    # Conv2d 1x1 weights stored as (C_in, C_out).
    w1 = jax.random.normal(kw1, (C_IN, FC_FILTERS), dtype=jnp.float32) * 0.05
    b1 = jax.random.normal(kb1, (FC_FILTERS,), dtype=jnp.float32) * 0.05
    w2 = jax.random.normal(kw2, (FC_FILTERS, 1), dtype=jnp.float32) * 0.05
    b2 = jax.random.normal(kb2, (1,), dtype=jnp.float32) * 0.05

    out = ccnn_fc_forward(x, w1, b1, w2, b2)
    out = jax.block_until_ready(out)

    ref = ccnn_fc_reference(x, w1, b1, w2, b2)
    assert out.shape == (B, 1, H, W), out.shape
    # bf16 first-matmul operands with f32 accumulation: loosen tolerance slightly.
    assert jnp.allclose(out, ref, atol=1e-2, rtol=1e-2), \
        float(jnp.max(jnp.abs(out - ref)))

    # TODO(synk): gt_depth_confidence_map / showConfidenceMap / BCE loss rely on
    # calib objects, numpy and cv2 host code; no tensor kernel equivalent.
    print("KERNEL_OK")
</pallas_src>

<mosaic_0001>
module attributes {stable_mosaic.version = 11 : i64} {
  func.func @ccnn_fc_kernel(%arg0: i32, %arg1: i32, %arg2: memref<2x288x256xf32, #tpu.memory_space<vmem>>, %arg3: memref<64x288xbf16, #tpu.memory_space<vmem>>, %arg4: memref<64x1xf32, #tpu.memory_space<vmem>>, %arg5: memref<64x1xf32, #tpu.memory_space<vmem>>, %arg6: memref<1xf32, #tpu.memory_space<smem>>, %arg7: memref<2x1x256xf32, #tpu.memory_space<vmem>>) attributes {dimension_semantics = [#tpu.dimension_semantics<parallel>, #tpu.dimension_semantics<parallel>], iteration_bounds = array<i64: 1, 1>, scalar_prefetch = 0 : i64, scratch_operands = 0 : i64, tpu.core_type = #tpu.core_type<tc>, window_params = [{transform_indices = @transform_0, window_bounds = array<i64: 2, 288, 256>}, {pipeline_mode = #tpu.pipeline_mode<synchronous>, transform_indices = @transform_1, window_bounds = array<i64: 64, 288>}, {pipeline_mode = #tpu.pipeline_mode<synchronous>, transform_indices = @transform_2, window_bounds = array<i64: 64, 1>}, {pipeline_mode = #tpu.pipeline_mode<synchronous>, transform_indices = @transform_3, window_bounds = array<i64: 64, 1>}, {transform_indices = @transform_4, window_bounds = array<i64: 1>}, {transform_indices = @transform_5, window_bounds = array<i64: 2, 1, 256>}]} {
    %c0 = arith.constant 0 : index
    %c0_0 = arith.constant 0 : index
    %0 = vector.load %arg3[%c0, %c0_0] : memref<64x288xbf16, #tpu.memory_space<vmem>>, vector<64x288xbf16>
    %c0_1 = arith.constant 0 : index
    %c0_2 = arith.constant 0 : index
    %1 = vector.load %arg4[%c0_1, %c0_2] : memref<64x1xf32, #tpu.memory_space<vmem>>, vector<64x1xf32>
    %c0_3 = arith.constant 0 : index
    %c0_4 = arith.constant 0 : index
    %2 = vector.load %arg5[%c0_3, %c0_4] : memref<64x1xf32, #tpu.memory_space<vmem>>, vector<64x1xf32>
    %c0_5 = arith.constant 0 : index
    %3 = memref.load %arg6[%c0_5] : memref<1xf32, #tpu.memory_space<smem>>
    %c0_6 = arith.constant 0 : index
    %c0_7 = arith.constant 0 : index
    %c0_8 = arith.constant 0 : index
    %4 = vector.load %arg2[%c0_6, %c0_7, %c0_8] : memref<2x288x256xf32, #tpu.memory_space<vmem>>, vector<1x288x256xf32>
    %5 = vector.shape_cast %4 : vector<1x288x256xf32> to vector<288x256xf32>
    %6 = arith.truncf %5 : vector<288x256xf32> to vector<288x256xbf16>
    %cst = arith.constant dense<0.000000e+00> : vector<64x256xf32>
    %7 = tpu.matmul %0, %6, %cst {dimension_numbers = #tpu.dot_dimension_numbers<[1], [0], [0], [1], [0, 0, 1, 1], [], []>} : vector<64x288xbf16>, vector<288x256xbf16>, vector<64x256xf32> -> vector<64x256xf32>
    %8 = vector.broadcast %1 : vector<64x1xf32> to vector<64x256xf32>
    %9 = arith.addf %7, %8 : vector<64x256xf32>
    %cst_9 = arith.constant 0.000000e+00 : f32
    %10 = vector.broadcast %cst_9 : f32 to vector<64x256xf32>
    %11 = arith.maximumf %9, %10 : vector<64x256xf32>
    %12 = vector.broadcast %2 : vector<64x1xf32> to vector<64x256xf32>
    %13 = arith.mulf %11, %12 : vector<64x256xf32>
    %cst_10 = arith.constant dense<0.000000e+00> : vector<256xf32>
    %14 = vector.multi_reduction <add>, %13, %cst_10 [0] : vector<64x256xf32> to vector<256xf32>
    %15 = vector.shape_cast %14 : vector<256xf32> to vector<1x256xf32>
    %16 = vector.broadcast %3 : f32 to vector<1x256xf32>
    %17 = arith.addf %15, %16 : vector<1x256xf32>
    %18 = arith.negf %17 : vector<1x256xf32>
    %19 = math.exp %18 : vector<1x256xf32>
    %cst_11 = arith.constant 1.000000e+00 : f32
    %20 = vector.broadcast %cst_11 : f32 to vector<1x256xf32>
    %21 = arith.addf %20, %19 : vector<1x256xf32>
    %22 = arith.divf %20, %21 : vector<1x256xf32>
    %c0_12 = arith.constant 0 : index
    %c0_13 = arith.constant 0 : index
    %c0_14 = arith.constant 0 : index
    %23 = vector.load %arg7[%c0_12, %c0_13, %c0_14] : memref<2x1x256xf32, #tpu.memory_space<vmem>>, vector<1x1x256xf32>
    %24 = vector.shape_cast %23 : vector<1x1x256xf32> to vector<1x256xf32>
    %25 = vector.shape_cast %22 : vector<1x256xf32> to vector<1x1x256xf32>
    tpu.vector_store %arg7[%c0_12, %c0_13, %c0_14], %25 {strides = array<i32>} : memref<2x1x256xf32, #tpu.memory_space<vmem>>, vector<1x1x256xf32>,
    %c1 = arith.constant 1 : index
    %c0_15 = arith.constant 0 : index
    %c0_16 = arith.constant 0 : index
    %26 = vector.load %arg2[%c1, %c0_15, %c0_16] : memref<2x288x256xf32, #tpu.memory_space<vmem>>, vector<1x288x256xf32>
    %27 = vector.shape_cast %26 : vector<1x288x256xf32> to vector<288x256xf32>
    %28 = arith.truncf %27 : vector<288x256xf32> to vector<288x256xbf16>
    %cst_17 = arith.constant dense<0.000000e+00> : vector<64x256xf32>
    %29 = tpu.matmul %0, %28, %cst_17 {dimension_numbers = #tpu.dot_dimension_numbers<[1], [0], [0], [1], [0, 0, 1, 1], [], []>} : vector<64x288xbf16>, vector<288x256xbf16>, vector<64x256xf32> -> vector<64x256xf32>
    %30 = vector.broadcast %1 : vector<64x1xf32> to vector<64x256xf32>
    %31 = arith.addf %29, %30 : vector<64x256xf32>
    %cst_18 = arith.constant 0.000000e+00 : f32
    %32 = vector.broadcast %cst_18 : f32 to vector<64x256xf32>
    %33 = arith.maximumf %31, %32 : vector<64x256xf32>
    %34 = vector.broadcast %2 : vector<64x1xf32> to vector<64x256xf32>
    %35 = arith.mulf %33, %34 : vector<64x256xf32>
    %cst_19 = arith.constant dense<0.000000e+00> : vector<256xf32>
    %36 = vector.multi_reduction <add>, %35, %cst_19 [0] : vector<64x256xf32> to vector<256xf32>
    %37 = vector.shape_cast %36 : vector<256xf32> to vector<1x256xf32>
    %38 = vector.broadcast %3 : f32 to vector<1x256xf32>
    %39 = arith.addf %37, %38 : vector<1x256xf32>
    %40 = arith.negf %39 : vector<1x256xf32>
    %41 = math.exp %40 : vector<1x256xf32>
    %cst_20 = arith.constant 1.000000e+00 : f32
    %42 = vector.broadcast %cst_20 : f32 to vector<1x256xf32>
    %43 = arith.addf %42, %41 : vector<1x256xf32>
    %44 = arith.divf %42, %43 : vector<1x256xf32>
    %c1_21 = arith.constant 1 : index
    %c0_22 = arith.constant 0 : index
    %c0_23 = arith.constant 0 : index
    %45 = vector.load %arg7[%c1_21, %c0_22, %c0_23] : memref<2x1x256xf32, #tpu.memory_space<vmem>>, vector<1x1x256xf32>
    %46 = vector.shape_cast %45 : vector<1x1x256xf32> to vector<1x256xf32>
    %47 = vector.shape_cast %44 : vector<1x256xf32> to vector<1x1x256xf32>
    tpu.vector_store %arg7[%c1_21, %c0_22, %c0_23], %47 {strides = array<i32>} : memref<2x1x256xf32, #tpu.memory_space<vmem>>, vector<1x1x256xf32>,
    return
  }
  func.func @transform_0(%arg0: i32, %arg1: i32) -> (i32, i32, i32) {
    %c0_i32 = arith.constant 0 : i32
    %c0_i32_0 = arith.constant 0 : i32
    return %arg0, %c0_i32, %arg1 : i32, i32, i32
  }
  func.func @transform_1(%arg0: i32, %arg1: i32) -> (i32, i32) {
    %c0_i32 = arith.constant 0 : i32
    %c0_i32_0 = arith.constant 0 : i32
    %c0_i32_1 = arith.constant 0 : i32
    return %c0_i32, %c0_i32_0 : i32, i32
  }
  func.func @transform_2(%arg0: i32, %arg1: i32) -> (i32, i32) {
    %c0_i32 = arith.constant 0 : i32
    %c0_i32_0 = arith.constant 0 : i32
    %c0_i32_1 = arith.constant 0 : i32
    return %c0_i32, %c0_i32_0 : i32, i32
  }
  func.func @transform_3(%arg0: i32, %arg1: i32) -> (i32, i32) {
    %c0_i32 = arith.constant 0 : i32
    %c0_i32_0 = arith.constant 0 : i32
    %c0_i32_1 = arith.constant 0 : i32
    return %c0_i32, %c0_i32_0 : i32, i32
  }
  func.func @transform_4(%arg0: i32, %arg1: i32) -> i32 {
    %c0_i32 = arith.constant 0 : i32
    %c0_i32_0 = arith.constant 0 : i32
    return %c0_i32 : i32
  }
  func.func @transform_5(%arg0: i32, %arg1: i32) -> (i32, i32, i32) {
    %c0_i32 = arith.constant 0 : i32
    %c0_i32_0 = arith.constant 0 : i32
    return %arg0, %c0_i32, %arg1 : i32, i32, i32
  }
}

</mosaic_0001>

<llo_original>
// kernel: tpu_custom_call.1
$region0: #{tpu_custom_call.1}
  #allocation0 [shape = 'u32[]', space=smem, size = 0x4, offset = 0x4, fixed_abs, tag = 'smem constant byte address 0x4 - core index']
  #allocation1 [shape = 'u32[144,128]{1,0:T(1,128)}', space=vmem, size = 0x12000, scoped, tag = 'internal scratch']
  #allocation2 [shape = 'f32[1]{0:T(128)S(6)}', space=smem, size = 0x200, scoped, tag = 'scoped memory for tpu_custom_call.1']
  %s0 = inlined_call_operand.hbm [shape: f32[2,288,256], index: 0, kind: input, shape index: {}]
  %s1 = inlined_call_operand.vmem [shape: bf16[64,288], index: 1, kind: input, shape index: {}]
  %s2 = inlined_call_operand.vmem [shape: f32[64,1], index: 2, kind: input, shape index: {}]
  %s3 = inlined_call_operand.vmem [shape: f32[64,1], index: 3, kind: input, shape index: {}]
  %s4 = inlined_call_operand.<no memory space> [shape: f32[1], index: 4, kind: input, shape index: {}]
  %s5 = inlined_call_operand.hbm [shape: f32[2,1,256], index: 5, kind: output, shape index: {}]
  %s6 = sld [smem:[#allocation0]]
  $region34: #{tpu_custom_call.1} parent=0
    _
  %s8 = ssub.s32 1, %s6
  %s9 = scalar_select 0, %s8, %s6
  %10 = sst [smem:[#allocation2]] %s4
  $region1: #{tpu_custom_call.1} parent=0
    #allocation3 [shape = 'u8[589824]{0}', space=vmem, size = 0x90000, scoped, tag = 'input window, operand 0, single buffered']
    #allocation4 [shape = 's32[1]{0}', space=sflag, size = 0x4, scoped, tag = 'scoped memory for tpu_custom_call.1']
    #allocation5 [shape = 's32[1]{0}', space=sflag, size = 0x4, scoped, tag = 'scoped memory for tpu_custom_call.1']
    #allocation6 [shape = 'u8[2048]{0}', space=vmem, size = 0x800, scoped, tag = 'output window, operand 0, single buffered']
    %11 = vsyncpa [#allocation4], 0
    %12 = vsyncpa [#allocation5], 0
    // Predicated region
    $region2: #{tpu_custom_call.1} parent=1 // pred_check
      _
    $region3: #{tpu_custom_call.1} parent=1 // pred_check_branch
      %14 = sbr.rel (0) target = $region5
    $region4: #{tpu_custom_call.1} parent=1 // pred_region
      %s16 = ssub.s32 18432, 18432
      %17 = vsyncadd [#allocation4], %s16
      %s18 = sshll.u32 [#allocation3], 4
      %s19 = int_to_ptr.vmem [resolvable:$true] %s18
      %24 = dma.hbm_to_vmem [thread:$0]  %s0, 18432, %s19, [#allocation4], 256, 256, 16
    $region5: #{tpu_custom_call.1} parent=1 // pred_fallthru
      _
    // Predicated region
    $region6: #{tpu_custom_call.1} parent=1 // pred_check
      _
    $region7: #{tpu_custom_call.1} parent=1 // pred_check_branch
      %26 = sbr.rel (0) target = $region9
    $region8: #{tpu_custom_call.1} parent=1 // pred_region
      _
    $region9: #{tpu_custom_call.1} parent=1 // pred_fallthru
      _
    // Predicated region
    $region10: #{tpu_custom_call.1} parent=1 // pred_check
      _
    $region11: #{tpu_custom_call.1} parent=1 // pred_check_branch
      %28 = sbr.rel (0) target = $region13
    $region12: #{tpu_custom_call.1} parent=1 // pred_region
      _
    $region13: #{tpu_custom_call.1} parent=1 // pred_fallthru
      _
    // Predicated region
    $region14: #{tpu_custom_call.1} parent=1 // pred_check
      _
    $region15: #{tpu_custom_call.1} parent=1 // pred_check_branch
      %30 = sbr.rel (0) target = $region17
    $region16: #{tpu_custom_call.1} parent=1 // pred_region
      _
    $region17: #{tpu_custom_call.1} parent=1 // pred_fallthru
      _
    // Predicated region
    $region18: #{tpu_custom_call.1} parent=1 // pred_check
      _
    $region19: #{tpu_custom_call.1} parent=1 // pred_check_branch
      %32 = sbr.rel (0) target = $region21
    $region20: #{tpu_custom_call.1} parent=1 // pred_region
      _
    $region21: #{tpu_custom_call.1} parent=1 // pred_fallthru
      _
    // Predicated region
    $region22: #{tpu_custom_call.1} parent=1 // pred_check
      _
    $region23: #{tpu_custom_call.1} parent=1 // pred_check_branch
      %34 = sbr.rel (0) target = $region25
    $region24: #{tpu_custom_call.1} parent=1 // pred_region
      %35 = dma.done [#allocation4], 18432
    $region25: #{tpu_custom_call.1} parent=1 // pred_fallthru
      _
    %v37 = vld [vmem:[%s1] sm:$0xff]
    %v38 = vld [vmem:[%s1 + $0x8] sm:$0xf]
    %v39 = vld [vmem:[%s1 + $0xc] sm:$0xff]
    %v40 = vld [vmem:[%s1 + $0x14] sm:$0xf]
    %v41 = vld [vmem:[%s1 + $0x18] sm:$0xff]
    %v42 = vld [vmem:[%s1 + $0x20] sm:$0xf]
    %v43 = vld [vmem:[%s1 + $0x24] sm:$0xff]
    %v44 = vld [vmem:[%s1 + $0x2c] sm:$0xf]
    %v45 = vld [vmem:[%s1 + $0x30] sm:$0xff]
    %v46 = vld [vmem:[%s1 + $0x38] sm:$0xf]
    %v47 = vld [vmem:[%s1 + $0x3c] sm:$0xff]
    %v48 = vld [vmem:[%s1 + $0x44] sm:$0xf]
    %v49 = vld [vmem:[%s1 + $0x48] sm:$0xff]
    %v50 = vld [vmem:[%s1 + $0x50] sm:$0xf]
    %v51 = vld [vmem:[%s1 + $0x54] sm:$0xff]
    %v52 = vld [vmem:[%s1 + $0x5c] sm:$0xf]
    %v53 = vld [vmem:[%s2] sm:$0xff]
    %v54 = vld [vmem:[%s2 + $0x8] sm:$0xff]
    %v55 = vld [vmem:[%s2 + $0x10] sm:$0xff]
    %v56 = vld [vmem:[%s2 + $0x18] sm:$0xff]
    %v57 = vld [vmem:[%s2 + $0x20] sm:$0xff]
    %v58 = vld [vmem:[%s2 + $0x28] sm:$0xff]
    %v59 = vld [vmem:[%s2 + $0x30] sm:$0xff]
    %v60 = vld [vmem:[%s2 + $0x38] sm:$0xff]
    %v61 = vld [vmem:[%s3] sm:$0xff]
    %v62 = vld [vmem:[%s3 + $0x8] sm:$0xff]
    %v63 = vld [vmem:[%s3 + $0x10] sm:$0xff]
    %v64 = vld [vmem:[%s3 + $0x18] sm:$0xff]
    %v65 = vld [vmem:[%s3 + $0x20] sm:$0xff]
    %v66 = vld [vmem:[%s3 + $0x28] sm:$0xff]
    %v67 = vld [vmem:[%s3 + $0x30] sm:$0xff]
    %v68 = vld [vmem:[%s3 + $0x38] sm:$0xff]
    %s69 = sld [smem:[#allocation2]]
    %v70 = vld [vmem:[#allocation3] sm:$0xff]
    %v71 = vld [vmem:[#allocation3 + $0x8] sm:$0xff]
    %v72 = vld [vmem:[#allocation3 + $0x10] sm:$0xff]
    %v73 = vld [vmem:[#allocation3 + $0x18] sm:$0xff]
    %v74 = vld [vmem:[#allocation3 + $0x20] sm:$0xff]
    %v75 = vld [vmem:[#allocation3 + $0x28] sm:$0xff]
    %v76 = vld [vmem:[#allocation3 + $0x30] sm:$0xff]
    %v77 = vld [vmem:[#allocation3 + $0x38] sm:$0xff]
    %v78 = vld [vmem:[#allocation3 + $0x40] sm:$0xff]
    %v79 = vld [vmem:[#allocation3 + $0x48] sm:$0xff]
    %v80 = vld [vmem:[#allocation3 + $0x50] sm:$0xff]
    %v81 = vld [vmem:[#allocation3 + $0x58] sm:$0xff]
    %v82 = vld [vmem:[#allocation3 + $0x60] sm:$0xff]
    %v83 = vld [vmem:[#allocation3 + $0x68] sm:$0xff]
    %v84 = vld [vmem:[#allocation3 + $0x70] sm:$0xff]
    %v85 = vld [vmem:[#allocation3 + $0x78] sm:$0xff]
    %v86 = vld [vmem:[#allocation3 + $0x80] sm:$0xff]
    %v87 = vld [vmem:[#allocation3 + $0x88] sm:$0xff]
    %v88 = vld [vmem:[#allocation3 + $0x90] sm:$0xff]
    %v89 = vld [vmem:[#allocation3 + $0x98] sm:$0xff]
    %v90 = vld [vmem:[#allocation3 + $0xa0] sm:$0xff]
    %v91 = vld [vmem:[#allocation3 + $0xa8] sm:$0xff]
    %v92 = vld [vmem:[#allocation3 + $0xb0] sm:$0xff]
    %v93 = vld [vmem:[#allocation3 + $0xb8] sm:$0xff]
    %v94 = vld [vmem:[#allocation3 + $0xc0] sm:$0xff]
    %v95 = vld [vmem:[#allocation3 + $0xc8] sm:$0xff]
    %v96 = vld [vmem:[#allocation3 + $0xd0] sm:$0xff]
    %v97 = vld [vmem:[#allocation3 + $0xd8] sm:$0xff]
    %v98 = vld [vmem:[#allocation3 + $0xe0] sm:$0xff]
    %v99 = vld [vmem:[#allocation3 + $0xe8] sm:$0xff]
    %v100 = vld [vmem:[#allocation3 + $0xf0] sm:$0xff]
    %v101 = vld [vmem:[#allocation3 + $0xf8] sm:$0xff]
    %v102 = vld [vmem:[#allocation3 + $0x100] sm:$0xff]
    %v103 = vld [vmem:[#allocation3 + $0x108] sm:$0xff]
    %v104 = vld [vmem:[#allocation3 + $0x110] sm:$0xff]
    %v105 = vld [vmem:[#allocation3 + $0x118] sm:$0xff]
    %v106 = vld [vmem:[#allocation3 + $0x120] sm:$0xff]
    %v107 = vld [vmem:[#allocation3 + $0x128] sm:$0xff]
    %v108 = vld [vmem:[#allocation3 + $0x130] sm:$0xff]
    %v109 = vld [vmem:[#allocation3 + $0x138] sm:$0xff]
    %v110 = vld [vmem:[#allocation3 + $0x140] sm:$0xff]
    %v111 = vld [vmem:[#allocation3 + $0x148] sm:$0xff]
    %v112 = vld [vmem:[#allocation3 + $0x150] sm:$0xff]
    %v113 = vld [vmem:[#allocation3 + $0x158] sm:$0xff]
    %v114 = vld [vmem:[#allocation3 + $0x160] sm:$0xff]
    %v115 = vld [vmem:[#allocation3 + $0x168] sm:$0xff]
    %v116 = vld [vmem:[#allocation3 + $0x170] sm:$0xff]
    %v117 = vld [vmem:[#allocation3 + $0x178] sm:$0xff]
    %v118 = vld [vmem:[#allocation3 + $0x180] sm:$0xff]
    %v119 = vld [vmem:[#allocation3 + $0x188] sm:$0xff]
    %v120 = vld [vmem:[#allocation3 + $0x190] sm:$0xff]
    %v121 = vld [vmem:[#allocation3 + $0x198] sm:$0xff]
    %v122 = vld [vmem:[#allocation3 + $0x1a0] sm:$0xff]
    %v123 = vld [vmem:[#allocation3 + $0x1a8] sm:$0xff]
    %v124 = vld [vmem:[#allocation3 + $0x1b0] sm:$0xff]
    %v125 = vld [vmem:[#allocation3 + $0x1b8] sm:$0xff]
    %v126 = vld [vmem:[#allocation3 + $0x1c0] sm:$0xff]
    %v127 = vld [vmem:[#allocation3 + $0x1c8] sm:$0xff]
    %v128 = vld [vmem:[#allocation3 + $0x1d0] sm:$0xff]
    %v129 = vld [vmem:[#allocation3 + $0x1d8] sm:$0xff]
    %v130 = vld [vmem:[#allocation3 + $0x1e0] sm:$0xff]
    %v131 = vld [vmem:[#allocation3 + $0x1e8] sm:$0xff]
    %v132 = vld [vmem:[#allocation3 + $0x1f0] sm:$0xff]
    %v133 = vld [vmem:[#allocation3 + $0x1f8] sm:$0xff]
    %v134 = vld [vmem:[#allocation3 + $0x200] sm:$0xff]
    %v135 = vld [vmem:[#allocation3 + $0x208] sm:$0xff]
    %v136 = vld [vmem:[#allocation3 + $0x210] sm:$0xff]
    %v137 = vld [vmem:[#allocation3 + $0x218] sm:$0xff]
    %v138 = vld [vmem:[#allocation3 + $0x220] sm:$0xff]
    %v139 = vld [vmem:[#allocation3 + $0x228] sm:$0xff]
    %v140 = vld [vmem:[#allocation3 + $0x230] sm:$0xff]
    %v141 = vld [vmem:[#allocation3 + $0x238] sm:$0xff]
    %v142 = vpack.c.bf16 %v72, %v70
    %v143 = vpack.c.bf16 %v73, %v71
    %v144 = vpack.c.bf16 %v76, %v74
    %v145 = vpack.c.bf16 %v77, %v75
    %v146 = vpack.c.bf16 %v80, %v78
    %v147 = vpack.c.bf16 %v81, %v79
    %v148 = vpack.c.bf16 %v84, %v82
    %v149 = vpack.c.bf16 %v85, %v83
    %v150 = vpack.c.bf16 %v88, %v86
    %v151 = vpack.c.bf16 %v89, %v87
    %v152 = vpack.c.bf16 %v92, %v90
    %v153 = vpack.c.bf16 %v93, %v91
    %v154 = vpack.c.bf16 %v96, %v94
    %v155 = vpack.c.bf16 %v97, %v95
    %v156 = vpack.c.bf16 %v100, %v98
    %v157 = vpack.c.bf16 %v101, %v99
    %v158 = vpack.c.bf16 %v104, %v102
    %v159 = vpack.c.bf16 %v105, %v103
    %v160 = vpack.c.bf16 %v108, %v106
    %v161 = vpack.c.bf16 %v109, %v107
    %v162 = vpack.c.bf16 %v112, %v110
    %v163 = vpack.c.bf16 %v113, %v111
    %v164 = vpack.c.bf16 %v116, %v114
    %v165 = vpack.c.bf16 %v117, %v115
    %v166 = vpack.c.bf16 %v120, %v118
    %v167 = vpack.c.bf16 %v121, %v119
    %v168 = vpack.c.bf16 %v124, %v122
    %v169 = vpack.c.bf16 %v125, %v123
    %v170 = vpack.c.bf16 %v128, %v126
    %v171 = vpack.c.bf16 %v129, %v127
    %v172 = vpack.c.bf16 %v132, %v130
    %v173 = vpack.c.bf16 %v133, %v131
    %v174 = vpack.c.bf16 %v136, %v134
    %v175 = vpack.c.bf16 %v137, %v135
    %v176 = vpack.c.bf16 %v140, %v138
    %v177 = vpack.c.bf16 %v141, %v139
    %179 = vset.pattern.permute.xlu0 0
    %180 = vperm.xlu0 %179, %v53
    %v181 = vpop.permute.xlu0 %180
    %184 = vset.pattern.permute.xlu0 0
    %185 = vperm.xlu0 %184, %v54
    %v186 = vpop.permute.xlu0 %185
    %189 = vset.pattern.permute.xlu0 0
    %190 = vperm.xlu0 %189, %v55
    %v191 = vpop.permute.xlu0 %190
    %194 = vset.pattern.permute.xlu0 0
    %195 = vperm.xlu0 %194, %v56
    %v196 = vpop.permute.xlu0 %195
    %199 = vset.pattern.permute.xlu0 0
    %200 = vperm.xlu0 %199, %v57
    %v201 = vpop.permute.xlu0 %200
    %204 = vset.pattern.permute.xlu0 0
    %205 = vperm.xlu0 %204, %v58
    %v206 = vpop.permute.xlu0 %205
    %209 = vset.pattern.permute.xlu0 0
    %210 = vperm.xlu0 %209, %v59
    %v211 = vpop.permute.xlu0 %210
    %214 = vset.pattern.permute.xlu0 0
    %215 = vperm.xlu0 %214, %v60
    %v216 = vpop.permute.xlu0 %215
    %v234 = vunpack.c.l.b16 %v37
    %v235 = vunpack.c.h.b16 %v37
    %v236 = vunpack.c.l.b16 %v38
    %v237 = vunpack.c.l.b16 %v39
    %v238 = vunpack.c.h.b16 %v39
    %v239 = vunpack.c.l.b16 %v40
    %v240 = vunpack.c.l.b16 %v41
    %v241 = vunpack.c.h.b16 %v41
    %v242 = vunpack.c.l.b16 %v42
    %v243 = vunpack.c.l.b16 %v43
    %v244 = vunpack.c.h.b16 %v43
    %v245 = vunpack.c.l.b16 %v44
    %v246 = vunpack.c.l.b16 %v45
    %v247 = vunpack.c.h.b16 %v45
    %v248 = vunpack.c.l.b16 %v46
    %v249 = vunpack.c.l.b16 %v47
    %v250 = vunpack.c.h.b16 %v47
    %v251 = vunpack.c.l.b16 %v48
    %v252 = vunpack.c.l.b16 %v49
    %v253 = vunpack.c.h.b16 %v49
    %v254 = vunpack.c.l.b16 %v50
    %v255 = vunpack.c.l.b16 %v51
    %v256 = vunpack.c.h.b16 %v51
    %v257 = vunpack.c.l.b16 %v52
    %v258 = vpack.c.b16 %v237, %v234
    %v259 = vpack.c.b16 %v238, %v235
    %v260 = vpack.c.b16 %v239, %v236
    %v261 = vpack.c.b16 %v243, %v240
    %v262 = vpack.c.b16 %v244, %v241
    %v263 = vpack.c.b16 %v245, %v242
    %v264 = vpack.c.b16 %v249, %v246
    %v265 = vpack.c.b16 %v250, %v247
    %v266 = vpack.c.b16 %v251, %v248
    %v267 = vpack.c.b16 %v255, %v252
    %v268 = vpack.c.b16 %v256, %v253
    %v269 = vpack.c.b16 %v257, %v254
    %vm278 = vcmask 261120
    %v280 = vsel %vm278, %v260, 0
    %v283 = vsel %vm278, %v263, 0
    %v286 = vsel %vm278, %v266, 0
    %v289 = vsel %vm278, %v269, 0
    %291 = vmatprep.subr.bf16.mxu0 %v143
    %292 = vmatpush1.bf16.msra.mxu0 %v142
    %293 = vmatprep.subr.bf16.mxu0 %v145
    %294 = vmatpush1.bf16.msra.mxu0 %v144
    %295 = vmatprep.subr.bf16.mxu0 %v147
    %296 = vmatpush1.bf16.msra.mxu0 %v146
    %297 = vmatprep.subr.bf16.mxu0 %v149
    %298 = vmatpush1.bf16.msra.mxu0 %v148
    %299 = vmatprep.subr.bf16.mxu0 %v151
    %300 = vmatpush1.bf16.msra.mxu0 %v150
    %301 = vmatprep.subr.bf16.mxu0 %v153
    %302 = vmatpush1.bf16.msra.mxu0 %v152
    %303 = vmatprep.subr.bf16.mxu0 %v155
    %304 = vmatpush1.bf16.msra.mxu0 %v154
    %305 = vmatprep.subr.bf16.mxu0 %v157
    %306 = vmatpush1.bf16.msra.mxu0 %v156
    %307 = vmatprep.subr.bf16.mxu0 %v159
    %308 = vmatpush1.bf16.msra.mxu0 %v158
    %309 = vmatprep.subr.bf16.mxu0 %v161
    %310 = vmatpush1.bf16.msra.mxu0 %v160
    %311 = vmatprep.subr.bf16.mxu0 %v163
    %312 = vmatpush1.bf16.msra.mxu0 %v162
    %313 = vmatprep.subr.bf16.mxu0 %v165
    %314 = vmatpush1.bf16.msra.mxu0 %v164
    %315 = vmatprep.subr.bf16.mxu0 %v167
    %316 = vmatpush1.bf16.msra.mxu0 %v166
    %317 = vmatprep.subr.bf16.mxu0 %v169
    %318 = vmatpush1.bf16.msra.mxu0 %v168
    %319 = vmatprep.subr.bf16.mxu0 %v171
    %320 = vmatpush1.bf16.msra.mxu0 %v170
    %321 = vmatprep.subr.bf16.mxu0 %v173
    %322 = vmatpush1.bf16.msra.mxu0 %v172
    %323 = vmatprep.mubr.bf16.mxu0 %v259
    %324 = vmatmul.mubr.bf16.gmra.mrb[0].mxu0 %v258
    %v325 = vpop.f32.mrb[0].mxu0
    %v326 = vadd.f32 %v181, %v325
    %v327 = vpop.f32.mrb[0].mxu0
    %v328 = vadd.f32 %v181, %v327
    %v329 = vpop.f32.mrb[0].mxu0
    %v330 = vadd.f32 %v186, %v329
    %v331 = vpop.f32.mrb[0].mxu0
    %v332 = vadd.f32 %v186, %v331
    %333 = vmatprep.mubr.bf16.mxu0 %v262
    %334 = vmatmul.mubr.bf16.gmra.mrb[0].mxu0 %v261
    %v335 = vpop.f32.mrb[0].mxu0
    %v336 = vadd.f32 %v191, %v335
    %v337 = vpop.f32.mrb[0].mxu0
    %v338 = vadd.f32 %v191, %v337
    %v339 = vpop.f32.mrb[0].mxu0
    %v340 = vadd.f32 %v196, %v339
    %v341 = vpop.f32.mrb[0].mxu0
    %v342 = vadd.f32 %v196, %v341
    %343 = vmatprep.mubr.bf16.mxu0 %v265
    %344 = vmatmul.mubr.bf16.gmra.mrb[0].mxu0 %v264
    %v345 = vpop.f32.mrb[0].mxu0
    %v346 = vadd.f32 %v201, %v345
    %v347 = vpop.f32.mrb[0].mxu0
    %v348 = vadd.f32 %v201, %v347
    %v349 = vpop.f32.mrb[0].mxu0
    %v350 = vadd.f32 %v206, %v349
    %v351 = vpop.f32.mrb[0].mxu0
    %v352 = vadd.f32 %v206, %v351
    %353 = vmatprep.mubr.bf16.mxu0 %v268
    %354 = vmatmul.mubr.bf16.gmra.mrb[0].mxu0 %v267
    %v355 = vpop.f32.mrb[0].mxu0
    %v356 = vadd.f32 %v211, %v355
    %v357 = vpop.f32.mrb[0].mxu0
    %v358 = vadd.f32 %v211, %v357
    %v359 = vpop.f32.mrb[0].mxu0
    %v360 = vadd.f32 %v216, %v359
    %v361 = vpop.f32.mrb[0].mxu0
    %v362 = vadd.f32 %v216, %v361
    %363 = vdwg.mxu0
    %364 = vmatprep.subr.bf16.mxu0 %v175
    %365 = vmatpush1.bf16.msra.mxu0 %v174
    %366 = vmatprep.subr.bf16.mxu0 %v177
    %367 = vmatpush1.bf16.msra.mxu0 %v176
    %368 = vmatprep.subr.bf16.mxu0 0
    %369 = vmatpush1.bf16.msra.mxu0 0
    %370 = vmatprep.subr.bf16.mxu0 0
    %371 = vmatpush1.bf16.msra.mxu0 0
    %372 = vmatprep.subr.bf16.mxu0 0
    %373 = vmatpush1.bf16.msra.mxu0 0
    %374 = vmatprep.subr.bf16.mxu0 0
    %375 = vmatpush1.bf16.msra.mxu0 0
    %376 = vmatprep.subr.bf16.mxu0 0
    %377 = vmatpush1.bf16.msra.mxu0 0
    %378 = vmatprep.subr.bf16.mxu0 0
    %379 = vmatpush1.bf16.msra.mxu0 0
    %380 = vmatprep.subr.bf16.mxu0 0
    %381 = vmatpush1.bf16.msra.mxu0 0
    %382 = vmatprep.subr.bf16.mxu0 0
    %383 = vmatpush1.bf16.msra.mxu0 0
    %384 = vmatprep.subr.bf16.mxu0 0
    %385 = vmatpush1.bf16.msra.mxu0 0
    %386 = vmatprep.subr.bf16.mxu0 0
    %387 = vmatpush1.bf16.msra.mxu0 0
    %388 = vmatprep.subr.bf16.mxu0 0
    %389 = vmatpush1.bf16.msra.mxu0 0
    %390 = vmatprep.subr.bf16.mxu0 0
    %391 = vmatpush1.bf16.msra.mxu0 0
    %392 = vmatprep.subr.bf16.mxu0 0
    %393 = vmatpush1.bf16.msra.mxu0 0
    %394 = vmatprep.subr.bf16.mxu0 0
    %395 = vmatpush1.bf16.msra.mxu0 0
    %396 = vmatprep.mubr.bf16.mxu0 0
    %397 = vmatmul.mubr.bf16.gmra.mrb[0].mxu0 %v280
    %v398 = vpop.f32.mrb[0].mxu0
    %v399 = vadd.f32 %v326, %v398
    %v400 = vpop.f32.mrb[0].mxu0
    %v401 = vadd.f32 %v328, %v400
    %v402 = vpop.f32.mrb[0].mxu0
    %v403 = vadd.f32 %v330, %v402
    %v404 = vpop.f32.mrb[0].mxu0
    %v405 = vadd.f32 %v332, %v404
    %406 = vmatprep.mubr.bf16.mxu0 0
    %407 = vmatmul.mubr.bf16.gmra.mrb[0].mxu0 %v283
    %v408 = vpop.f32.mrb[0].mxu0
    %v409 = vadd.f32 %v336, %v408
    %v410 = vpop.f32.mrb[0].mxu0
    %v411 = vadd.f32 %v338, %v410
    %v412 = vpop.f32.mrb[0].mxu0
    %v413 = vadd.f32 %v340, %v412
    %v414 = vpop.f32.mrb[0].mxu0
    %v415 = vadd.f32 %v342, %v414
    %416 = vmatprep.mubr.bf16.mxu0 0
    %417 = vmatmul.mubr.bf16.gmra.mrb[0].mxu0 %v286
    %v418 = vpop.f32.mrb[0].mxu0
    %v419 = vadd.f32 %v346, %v418
    %v420 = vpop.f32.mrb[0].mxu0
    %v421 = vadd.f32 %v348, %v420
    %v422 = vpop.f32.mrb[0].mxu0
    %v423 = vadd.f32 %v350, %v422
    %v424 = vpop.f32.mrb[0].mxu0
    %v425 = vadd.f32 %v352, %v424
    %426 = vmatprep.mubr.bf16.mxu0 0
    %427 = vmatmul.mubr.bf16.gmra.mrb[0].mxu0 %v289
    %v428 = vpop.f32.mrb[0].mxu0
    %v429 = vadd.f32 %v356, %v428
    %v430 = vpop.f32.mrb[0].mxu0
    %v431 = vadd.f32 %v358, %v430
    %v432 = vpop.f32.mrb[0].mxu0
    %v433 = vadd.f32 %v360, %v432
    %v434 = vpop.f32.mrb[0].mxu0
    %v435 = vadd.f32 %v362, %v434
    %436 = vdwg.mxu0
    %v437 = vmax.f32 %v399, 0.0
    %v438 = vmax.f32 %v401, 0.0
    %v439 = vmax.f32 %v403, 0.0
    %v440 = vmax.f32 %v405, 0.0
    %v441 = vmax.f32 %v409, 0.0
    %v442 = vmax.f32 %v411, 0.0
    %v443 = vmax.f32 %v413, 0.0
    %v444 = vmax.f32 %v415, 0.0
    %v445 = vmax.f32 %v419, 0.0
    %v446 = vmax.f32 %v421, 0.0
    %v447 = vmax.f32 %v423, 0.0
    %v448 = vmax.f32 %v425, 0.0
    %v449 = vmax.f32 %v429, 0.0
    %v450 = vmax.f32 %v431, 0.0
    %v451 = vmax.f32 %v433, 0.0
    %v452 = vmax.f32 %v435, 0.0
    %454 = vset.pattern.permute.xlu0 0
    %455 = vperm.xlu0 %454, %v61
    %v456 = vpop.permute.xlu0 %455
    %459 = vset.pattern.permute.xlu0 0
    %460 = vperm.xlu0 %459, %v62
    %v461 = vpop.permute.xlu0 %460
    %464 = vset.pattern.permute.xlu0 0
    %465 = vperm.xlu0 %464, %v63
    %v466 = vpop.permute.xlu0 %465
    %469 = vset.pattern.permute.xlu0 0
    %470 = vperm.xlu0 %469, %v64
    %v471 = vpop.permute.xlu0 %470
    %474 = vset.pattern.permute.xlu0 0
    %475 = vperm.xlu0 %474, %v65
    %v476 = vpop.permute.xlu0 %475
    %479 = vset.pattern.permute.xlu0 0
    %480 = vperm.xlu0 %479, %v66
    %v481 = vpop.permute.xlu0 %480
    %484 = vset.pattern.permute.xlu0 0
    %485 = vperm.xlu0 %484, %v67
    %v486 = vpop.permute.xlu0 %485
    %489 = vset.pattern.permute.xlu0 0
    %490 = vperm.xlu0 %489, %v68
    %v491 = vpop.permute.xlu0 %490
    %v493 = vmul.f32 %v437, %v456
    %v494 = vmul.f32 %v438, %v456
    %v495 = vmul.f32 %v439, %v461
    %v496 = vmul.f32 %v440, %v461
    %v497 = vmul.f32 %v441, %v466
    %v498 = vmul.f32 %v442, %v466
    %v499 = vmul.f32 %v443, %v471
    %v500 = vmul.f32 %v444, %v471
    %v501 = vmul.f32 %v445, %v476
    %v502 = vmul.f32 %v446, %v476
    %v503 = vmul.f32 %v447, %v481
    %v504 = vmul.f32 %v448, %v481
    %v505 = vmul.f32 %v449, %v486
    %v506 = vmul.f32 %v450, %v486
    %v507 = vmul.f32 %v451, %v491
    %v508 = vmul.f32 %v452, %v491
    %v509 = vadd.f32 %v493, %v495
    %v510 = vadd.f32 %v509, %v497
    %v511 = vadd.f32 %v510, %v499
    %v512 = vadd.f32 %v511, %v501
    %v513 = vadd.f32 %v512, %v503
    %v514 = vadd.f32 %v513, %v505
    %v515 = vadd.f32 %v514, %v507
    %v516 = vrot.slane %v515, 4
    %v517 = vadd.f32 %v515, %v516
    %v518 = vrot.slane %v517, 2
    %v519 = vadd.f32 %v517, %v518
    %v520 = vrot.slane %v519, 1
    %v521 = vadd.f32 %v519, %v520
    %v522 = vadd.f32 %v494, %v496
    %v523 = vadd.f32 %v522, %v498
    %v524 = vadd.f32 %v523, %v500
    %v525 = vadd.f32 %v524, %v502
    %v526 = vadd.f32 %v525, %v504
    %v527 = vadd.f32 %v526, %v506
    %v528 = vadd.f32 %v527, %v508
    %v529 = vrot.slane %v528, 4
    %v530 = vadd.f32 %v528, %v529
    %v531 = vrot.slane %v530, 2
    %v532 = vadd.f32 %v530, %v531
    %v533 = vrot.slane %v532, 1
    %v534 = vadd.f32 %v532, %v533
    %v535 = vstv %s69
    %v536 = vadd.f32 %v521, %v535
    %v537 = vadd.f32 %v534, %v535
    %v538 = vxor.u32 %v536, 2147483648
    %v539 = vxor.u32 %v537, 2147483648
    %v540 = vmul.f32 %v538, 1.442695
    %v541 = vpow.pop %v540
    %v542 = vmul.f32 %v539, 1.442695
    %v543 = vpow.pop %v542
    %v544 = vadd.f32 %v541, 1.0
    %v545 = vadd.f32 %v543, 1.0
    %v546 = vrcp.pop %v544
    %v547 = vmul.f32 1.0, %v546
    %v548 = vrcp.pop %v545
    %v549 = vmul.f32 1.0, %v548
    %v552 = vcombine.low %v547, %v549
    %v554 = vunpack.c.l.s4 1966171168
    %v555 = vunpack.c.0.s8 %v554
    %v556 = vlaneseq
    %v557 = vshrl.u32 %v556, 7
    %v558 = vsub.s32 %v555, %v557
    %v559 = vrot.slane %v552, %v558
    %v561 = vunpack.c.l.s4 1966171168
    %v562 = vunpack.c.0.s8 %v561
    %v563 = vlaneseq
    %v564 = vshrl.u32 %v563, 7
    %v565 = vsub.s32 %v562, %v564
    %v566 = vrot.slane %v559, %v565
    %v568 = vlaneseq
    %vm569 = vcmp.ge.s32.totalorder %v568, 0
    %vm570 = vcmp.lt.s32.totalorder %v568, 256
    %vm571 = vmand %vm569, %vm570
    %572 = vst.msk [vmem:[#allocation6] sm:$0x3] %vm571, %v566
    %s573 = scalar_lea.vmem [#allocation3], 576
    %v574 = vld [vmem:[%s573] sm:$0xff]
    %v575 = vld [vmem:[%s573 + $0x8] sm:$0xff]
    %v576 = vld [vmem:[%s573 + $0x10] sm:$0xff]
    %v577 = vld [vmem:[%s573 + $0x18] sm:$0xff]
    %v578 = vld [vmem:[%s573 + $0x20] sm:$0xff]
    %v579 = vld [vmem:[%s573 + $0x28] sm:$0xff]
    %v580 = vld [vmem:[%s573 + $0x30] sm:$0xff]
    %v581 = vld [vmem:[%s573 + $0x38] sm:$0xff]
    %v582 = vld [vmem:[%s573 + $0x40] sm:$0xff]
    %v583 = vld [vmem:[%s573 + $0x48] sm:$0xff]
    %v584 = vld [vmem:[%s573 + $0x50] sm:$0xff]
    %v585 = vld [vmem:[%s573 + $0x58] sm:$0xff]
    %v586 = vld [vmem:[%s573 + $0x60] sm:$0xff]
    %v587 = vld [vmem:[%s573 + $0x68] sm:$0xff]
    %v588 = vld [vmem:[%s573 + $0x70] sm:$0xff]
    %v589 = vld [vmem:[%s573 + $0x78] sm:$0xff]
    %v590 = vld [vmem:[%s573 + $0x80] sm:$0xff]
    %v591 = vld [vmem:[%s573 + $0x88] sm:$0xff]
    %v592 = vld [vmem:[%s573 + $0x90] sm:$0xff]
    %v593 = vld [vmem:[%s573 + $0x98] sm:$0xff]
    %v594 = vld [vmem:[%s573 + $0xa0] sm:$0xff]
    %v595 = vld [vmem:[%s573 + $0xa8] sm:$0xff]
    %v596 = vld [vmem:[%s573 + $0xb0] sm:$0xff]
    %v597 = vld [vmem:[%s573 + $0xb8] sm:$0xff]
    %v598 = vld [vmem:[%s573 + $0xc0] sm:$0xff]
    %v599 = vld [vmem:[%s573 + $0xc8] sm:$0xff]
    %v600 = vld [vmem:[%s573 + $0xd0] sm:$0xff]
    %v601 = vld [vmem:[%s573 + $0xd8] sm:$0xff]
    %v602 = vld [vmem:[%s573 + $0xe0] sm:$0xff]
    %v603 = vld [vmem:[%s573 + $0xe8] sm:$0xff]
    %v604 = vld [vmem:[%s573 + $0xf0] sm:$0xff]
    %v605 = vld [vmem:[%s573 + $0xf8] sm:$0xff]
    %v606 = vld [vmem:[%s573 + $0x100] sm:$0xff]
    %v607 = vld [vmem:[%s573 + $0x108] sm:$0xff]
    %v608 = vld [vmem:[%s573 + $0x110] sm:$0xff]
    %v609 = vld [vmem:[%s573 + $0x118] sm:$0xff]
    %v610 = vld [vmem:[%s573 + $0x120] sm:$0xff]
    %v611 = vld [vmem:[%s573 + $0x128] sm:$0xff]
    %v612 = vld [vmem:[%s573 + $0x130] sm:$0xff]
    %v613 = vld [vmem:[%s573 + $0x138] sm:$0xff]
    %v614 = vld [vmem:[%s573 + $0x140] sm:$0xff]
    %v615 = vld [vmem:[%s573 + $0x148] sm:$0xff]
    %v616 = vld [vmem:[%s573 + $0x150] sm:$0xff]
    %v617 = vld [vmem:[%s573 + $0x158] sm:$0xff]
    %v618 = vld [vmem:[%s573 + $0x160] sm:$0xff]
    %v619 = vld [vmem:[%s573 + $0x168] sm:$0xff]
    %v620 = vld [vmem:[%s573 + $0x170] sm:$0xff]
    %v621 = vld [vmem:[%s573 + $0x178] sm:$0xff]
    %v622 = vld [vmem:[%s573 + $0x180] sm:$0xff]
    %v623 = vld [vmem:[%s573 + $0x188] sm:$0xff]
    %v624 = vld [vmem:[%s573 + $0x190] sm:$0xff]
    %v625 = vld [vmem:[%s573 + $0x198] sm:$0xff]
    %v626 = vld [vmem:[%s573 + $0x1a0] sm:$0xff]
    %v627 = vld [vmem:[%s573 + $0x1a8] sm:$0xff]
    %v628 = vld [vmem:[%s573 + $0x1b0] sm:$0xff]
    %v629 = vld [vmem:[%s573 + $0x1b8] sm:$0xff]
    %v630 = vld [vmem:[%s573 + $0x1c0] sm:$0xff]
    %v631 = vld [vmem:[%s573 + $0x1c8] sm:$0xff]
    %v632 = vld [vmem:[%s573 + $0x1d0] sm:$0xff]
    %v633 = vld [vmem:[%s573 + $0x1d8] sm:$0xff]
    %v634 = vld [vmem:[%s573 + $0x1e0] sm:$0xff]
    %v635 = vld [vmem:[%s573 + $0x1e8] sm:$0xff]
    %v636 = vld [vmem:[%s573 + $0x1f0] sm:$0xff]
    %v637 = vld [vmem:[%s573 + $0x1f8] sm:$0xff]
    %v638 = vld [vmem:[%s573 + $0x200] sm:$0xff]
    %v639 = vld [vmem:[%s573 + $0x208] sm:$0xff]
    %v640 = vld [vmem:[%s573 + $0x210] sm:$0xff]
    %v641 = vld [vmem:[%s573 + $0x218] sm:$0xff]
    %v642 = vld [vmem:[%s573 + $0x220] sm:$0xff]
    %v643 = vld [vmem:[%s573 + $0x228] sm:$0xff]
    %v644 = vld [vmem:[%s573 + $0x230] sm:$0xff]
    %v645 = vld [vmem:[%s573 + $0x238] sm:$0xff]
    %v646 = vpack.c.bf16 %v576, %v574
    %v647 = vpack.c.bf16 %v577, %v575
    %v648 = vpack.c.bf16 %v580, %v578
    %v649 = vpack.c.bf16 %v581, %v579
    %v650 = vpack.c.bf16 %v584, %v582
    %v651 = vpack.c.bf16 %v585, %v583
    %v652 = vpack.c.bf16 %v588, %v586
    %v653 = vpack.c.bf16 %v589, %v587
    %v654 = vpack.c.bf16 %v592, %v590
    %v655 = vpack.c.bf16 %v593, %v591
    %v656 = vpack.c.bf16 %v596, %v594
    %v657 = vpack.c.bf16 %v597, %v595
    %v658 = vpack.c.bf16 %v600, %v598
    %v659 = vpack.c.bf16 %v601, %v599
    %v660 = vpack.c.bf16 %v604, %v602
    %v661 = vpack.c.bf16 %v605, %v603
    %v662 = vpack.c.bf16 %v608, %v606
    %v663 = vpack.c.bf16 %v609, %v607
    %v664 = vpack.c.bf16 %v612, %v610
    %v665 = vpack.c.bf16 %v613, %v611
    %v666 = vpack.c.bf16 %v616, %v614
    %v667 = vpack.c.bf16 %v617, %v615
    %v668 = vpack.c.bf16 %v620, %v618
    %v669 = vpack.c.bf16 %v621, %v619
    %v670 = vpack.c.bf16 %v624, %v622
    %v671 = vpack.c.bf16 %v625, %v623
    %v672 = vpack.c.bf16 %v628, %v626
    %v673 = vpack.c.bf16 %v629, %v627
    %v674 = vpack.c.bf16 %v632, %v630
    %v675 = vpack.c.bf16 %v633, %v631
    %v676 = vpack.c.bf16 %v636, %v634
    %v677 = vpack.c.bf16 %v637, %v635
    %v678 = vpack.c.bf16 %v640, %v638
    %v679 = vpack.c.bf16 %v641, %v639
    %v680 = vpack.c.bf16 %v644, %v642
    %v681 = vpack.c.bf16 %v645, %v643
    %682 = vmatprep.subr.bf16.mxu0 %v647
    %683 = vmatpush1.bf16.msra.mxu0 %v646
    %684 = vmatprep.subr.bf16.mxu0 %v649
    %685 = vmatpush1.bf16.msra.mxu0 %v648
    %686 = vmatprep.subr.bf16.mxu0 %v651
    %687 = vmatpush1.bf16.msra.mxu0 %v650
    %688 = vmatprep.subr.bf16.mxu0 %v653
    %689 = vmatpush1.bf16.msra.mxu0 %v652
    %690 = vmatprep.subr.bf16.mxu0 %v655
    %691 = vmatpush1.bf16.msra.mxu0 %v654
    %692 = vmatprep.subr.bf16.mxu0 %v657
    %693 = vmatpush1.bf16.msra.mxu0 %v656
    %694 = vmatprep.subr.bf16.mxu0 %v659
    %695 = vmatpush1.bf16.msra.mxu0 %v658
    %696 = vmatprep.subr.bf16.mxu0 %v661
    %697 = vmatpush1.bf16.msra.mxu0 %v660
    %698 = vmatprep.subr.bf16.mxu0 %v663
    %699 = vmatpush1.bf16.msra.mxu0 %v662
    %700 = vmatprep.subr.bf16.mxu0 %v665
    %701 = vmatpush1.bf16.msra.mxu0 %v664
    %702 = vmatprep.subr.bf16.mxu0 %v667
    %703 = vmatpush1.bf16.msra.mxu0 %v666
    %704 = vmatprep.subr.bf16.mxu0 %v669
    %705 = vmatpush1.bf16.msra.mxu0 %v668
    %706 = vmatprep.subr.bf16.mxu0 %v671
    %707 = vmatpush1.bf16.msra.mxu0 %v670
    %708 = vmatprep.subr.bf16.mxu0 %v673
    %709 = vmatpush1.bf16.msra.mxu0 %v672
    %710 = vmatprep.subr.bf16.mxu0 %v675
    %711 = vmatpush1.bf16.msra.mxu0 %v674
    %712 = vmatprep.subr.bf16.mxu0 %v677
    %713 = vmatpush1.bf16.msra.mxu0 %v676
    %714 = vmatprep.mubr.bf16.mxu0 %v259
    %715 = vmatmul.mubr.bf16.gmra.mrb[0].mxu0 %v258
    %v716 = vpop.f32.mrb[0].mxu0
    %v717 = vadd.f32 %v181, %v716
    %v718 = vpop.f32.mrb[0].mxu0
    %v719 = vadd.f32 %v181, %v718
    %v720 = vpop.f32.mrb[0].mxu0
    %v721 = vadd.f32 %v186, %v720
    %v722 = vpop.f32.mrb[0].mxu0
    %v723 = vadd.f32 %v186, %v722
    %724 = vmatprep.mubr.bf16.mxu0 %v262
    %725 = vmatmul.mubr.bf16.gmra.mrb[0].mxu0 %v261
    %v726 = vpop.f32.mrb[0].mxu0
    %v727 = vadd.f32 %v191, %v726
    %v728 = vpop.f32.mrb[0].mxu0
    %v729 = vadd.f32 %v191, %v728
    %v730 = vpop.f32.mrb[0].mxu0
    %v731 = vadd.f32 %v196, %v730
    %v732 = vpop.f32.mrb[0].mxu0
    %v733 = vadd.f32 %v196, %v732
    %734 = vmatprep.mubr.bf16.mxu0 %v265
    %735 = vmatmul.mubr.bf16.gmra.mrb[0].mxu0 %v264
    %v736 = vpop.f32.mrb[0].mxu0
    %v737 = vadd.f32 %v201, %v736
    %v738 = vpop.f32.mrb[0].mxu0
    %v739 = vadd.f32 %v201, %v738
    %v740 = vpop.f32.mrb[0].mxu0
    %v741 = vadd.f32 %v206, %v740
    %v742 = vpop.f32.mrb[0].mxu0
    %v743 = vadd.f32 %v206, %v742
    %744 = vmatprep.mubr.bf16.mxu0 %v268
    %745 = vmatmul.mubr.bf16.gmra.mrb[0].mxu0 %v267
    %v746 = vpop.f32.mrb[0].mxu0
    %v747 = vadd.f32 %v211, %v746
    %v748 = vpop.f32.mrb[0].mxu0
    %v749 = vadd.f32 %v211, %v748
    %v750 = vpop.f32.mrb[0].mxu0
    %v751 = vadd.f32 %v216, %v750
    %v752 = vpop.f32.mrb[0].mxu0
    %v753 = vadd.f32 %v216, %v752
    %754 = vdwg.mxu0
    %755 = vmatprep.subr.bf16.mxu0 %v679
    %756 = vmatpush1.bf16.msra.mxu0 %v678
    %757 = vmatprep.subr.bf16.mxu0 %v681
    %758 = vmatpush1.bf16.msra.mxu0 %v680
    %759 = vmatprep.subr.bf16.mxu0 0
    %760 = vmatpush1.bf16.msra.mxu0 0
    %761 = vmatprep.subr.bf16.mxu0 0
    %762 = vmatpush1.bf16.msra.mxu0 0
    %763 = vmatprep.subr.bf16.mxu0 0
    %764 = vmatpush1.bf16.msra.mxu0 0
    %765 = vmatprep.subr.bf16.mxu0 0
    %766 = vmatpush1.bf16.msra.mxu0 0
    %767 = vmatprep.subr.bf16.mxu0 0
    %768 = vmatpush1.bf16.msra.mxu0 0
    %769 = vmatprep.subr.bf16.mxu0 0
    %770 = vmatpush1.bf16.msra.mxu0 0
    %771 = vmatprep.subr.bf16.mxu0 0
    %772 = vmatpush1.bf16.msra.mxu0 0
    %773 = vmatprep.subr.bf16.mxu0 0
    %774 = vmatpush1.bf16.msra.mxu0 0
    %775 = vmatprep.subr.bf16.mxu0 0
    %776 = vmatpush1.bf16.msra.mxu0 0
    %777 = vmatprep.subr.bf16.mxu0 0
    %778 = vmatpush1.bf16.msra.mxu0 0
    %779 = vmatprep.subr.bf16.mxu0 0
    %780 = vmatpush1.bf16.msra.mxu0 0
    %781 = vmatprep.subr.bf16.mxu0 0
    %782 = vmatpush1.bf16.msra.mxu0 0
    %783 = vmatprep.subr.bf16.mxu0 0
    %784 = vmatpush1.bf16.msra.mxu0 0
    %785 = vmatprep.subr.bf16.mxu0 0
    %786 = vmatpush1.bf16.msra.mxu0 0
    %787 = vmatprep.mubr.bf16.mxu0 0
    %788 = vmatmul.mubr.bf16.gmra.mrb[0].mxu0 %v280
    %v789 = vpop.f32.mrb[0].mxu0
    %v790 = vadd.f32 %v717, %v789
    %v791 = vpop.f32.mrb[0].mxu0
    %v792 = vadd.f32 %v719, %v791
    %v793 = vpop.f32.mrb[0].mxu0
    %v794 = vadd.f32 %v721, %v793
    %v795 = vpop.f32.mrb[0].mxu0
    %v796 = vadd.f32 %v723, %v795
    %797 = vmatprep.mubr.bf16.mxu0 0
    %798 = vmatmul.mubr.bf16.gmra.mrb[0].mxu0 %v283
    %v799 = vpop.f32.mrb[0].mxu0
    %v800 = vadd.f32 %v727, %v799
    %v801 = vpop.f32.mrb[0].mxu0
    %v802 = vadd.f32 %v729, %v801
    %v803 = vpop.f32.mrb[0].mxu0
    %v804 = vadd.f32 %v731, %v803
    %v805 = vpop.f32.mrb[0].mxu0
    %v806 = vadd.f32 %v733, %v805
    %807 = vmatprep.mubr.bf16.mxu0 0
    %808 = vmatmul.mubr.bf16.gmra.mrb[0].mxu0 %v286
    %v809 = vpop.f32.mrb[0].mxu0
    %v810 = vadd.f32 %v737, %v809
    %v811 = vpop.f32.mrb[0].mxu0
    %v812 = vadd.f32 %v739, %v811
    %v813 = vpop.f32.mrb[0].mxu0
    %v814 = vadd.f32 %v741, %v813
    %v815 = vpop.f32.mrb[0].mxu0
    %v816 = vadd.f32 %v743, %v815
    %817 = vmatprep.mubr.bf16.mxu0 0
    %818 = vmatmul.mubr.bf16.gmra.mrb[0].mxu0 %v289
    %v819 = vpop.f32.mrb[0].mxu0
    %v820 = vadd.f32 %v747, %v819
    %v821 = vpop.f32.mrb[0].mxu0
    %v822 = vadd.f32 %v749, %v821
    %v823 = vpop.f32.mrb[0].mxu0
    %v824 = vadd.f32 %v751, %v823
    %v825 = vpop.f32.mrb[0].mxu0
    %v826 = vadd.f32 %v753, %v825
    %827 = vdwg.mxu0
    %v828 = vmax.f32 %v790, 0.0
    %v829 = vmax.f32 %v792, 0.0
    %v830 = vmax.f32 %v794, 0.0
    %v831 = vmax.f32 %v796, 0.0
    %v832 = vmax.f32 %v800, 0.0
    %v833 = vmax.f32 %v802, 0.0
    %v834 = vmax.f32 %v804, 0.0
    %v835 = vmax.f32 %v806, 0.0
    %v836 = vmax.f32 %v810, 0.0
    %v837 = vmax.f32 %v812, 0.0
    %v838 = vmax.f32 %v814, 0.0
    %v839 = vmax.f32 %v816, 0.0
    %v840 = vmax.f32 %v820, 0.0
    %v841 = vmax.f32 %v822, 0.0
    %v842 = vmax.f32 %v824, 0.0
    %v843 = vmax.f32 %v826, 0.0
    %v844 = vmul.f32 %v828, %v456
    %v845 = vmul.f32 %v829, %v456
    %v846 = vmul.f32 %v830, %v461
    %v847 = vmul.f32 %v831, %v461
    %v848 = vmul.f32 %v832, %v466
    %v849 = vmul.f32 %v833, %v466
    %v850 = vmul.f32 %v834, %v471
    %v851 = vmul.f32 %v835, %v471
    %v852 = vmul.f32 %v836, %v476
    %v853 = vmul.f32 %v837, %v476
    %v854 = vmul.f32 %v838, %v481
    %v855 = vmul.f32 %v839, %v481
    %v856 = vmul.f32 %v840, %v486
    %v857 = vmul.f32 %v841, %v486
    %v858 = vmul.f32 %v842, %v491
    %v859 = vmul.f32 %v843, %v491
    %v860 = vadd.f32 %v844, %v846
    %v861 = vadd.f32 %v860, %v848
    %v862 = vadd.f32 %v861, %v850
    %v863 = vadd.f32 %v862, %v852
    %v864 = vadd.f32 %v863, %v854
    %v865 = vadd.f32 %v864, %v856
    %v866 = vadd.f32 %v865, %v858
    %v867 = vrot.slane %v866, 4
    %v868 = vadd.f32 %v866, %v867
    %v869 = vrot.slane %v868, 2
    %v870 = vadd.f32 %v868, %v869
    %v871 = vrot.slane %v870, 1
    %v872 = vadd.f32 %v870, %v871
    %v873 = vadd.f32 %v845, %v847
    %v874 = vadd.f32 %v873, %v849
    %v875 = vadd.f32 %v874, %v851
    %v876 = vadd.f32 %v875, %v853
    %v877 = vadd.f32 %v876, %v855
    %v878 = vadd.f32 %v877, %v857
    %v879 = vadd.f32 %v878, %v859
    %v880 = vrot.slane %v879, 4
    %v881 = vadd.f32 %v879, %v880
    %v882 = vrot.slane %v881, 2
    %v883 = vadd.f32 %v881, %v882
    %v884 = vrot.slane %v883, 1
    %v885 = vadd.f32 %v883, %v884
    %v886 = vadd.f32 %v872, %v535
    %v887 = vadd.f32 %v885, %v535
    %v888 = vxor.u32 %v886, 2147483648
    %v889 = vxor.u32 %v887, 2147483648
    %v890 = vmul.f32 %v888, 1.442695
    %v891 = vpow.pop %v890
    %v892 = vmul.f32 %v889, 1.442695
    %v893 = vpow.pop %v892
    %v894 = vadd.f32 %v891, 1.0
    %v895 = vadd.f32 %v893, 1.0
    %v896 = vrcp.pop %v894
    %v897 = vmul.f32 1.0, %v896
    %v898 = vrcp.pop %v895
    %v899 = vmul.f32 1.0, %v898
    %v902 = vcombine.low %v897, %v899
    %v904 = vunpack.c.l.s4 1966171168
    %v905 = vunpack.c.0.s8 %v904
    %v906 = vlaneseq
    %v907 = vshrl.u32 %v906, 7
    %v908 = vsub.s32 %v905, %v907
    %v909 = vrot.slane %v902, %v908
    %v911 = vunpack.c.l.s4 1966171168
    %v912 = vunpack.c.0.s8 %v911
    %v913 = vlaneseq
    %v914 = vshrl.u32 %v913, 7
    %v915 = vsub.s32 %v912, %v914
    %v916 = vrot.slane %v909, %v915
    %s918 = scalar_lea.vmem [#allocation6], 2
    %919 = vst.msk [vmem:[%s918] sm:$0x3] %vm571, %v916
    // Predicated region
    $region26: #{tpu_custom_call.1} parent=1 // pred_check
      _
    $region27: #{tpu_custom_call.1} parent=1 // pred_check_branch
      %921 = sbr.rel (0) target = $region29
    $region28: #{tpu_custom_call.1} parent=1 // pred_region
      %s923 = ssub.s32 64, 64
      %924 = vsyncadd [#allocation5], %s923
      %s925 = sshll.u32 [#allocation6], 4
      %s926 = int_to_ptr.vmem [resolvable:$true] %s925
      %931 = dma.vmem_to_hbm [thread:$0]  %s926, 64, %s5, [#allocation5], 32, 32, 2
    $region29: #{tpu_custom_call.1} parent=1 // pred_fallthru
      _
    // Predicated region
    $region30: #{tpu_custom_call.1} parent=1 // pred_check
      _
    $region31: #{tpu_custom_call.1} parent=1 // pred_check_branch
      %933 = sbr.rel (0) target = $region33
    $region32: #{tpu_custom_call.1} parent=1 // pred_region
      %934 = dma.done [#allocation5], 64
    $region33: #{tpu_custom_call.1} parent=1 // pred_fallthru
      _
    %935 = vsyncpa [#allocation4], 1
    %936 = vsyncpa [#allocation5], 1

</llo_original>
